<compile_context>
chip_gen: v5e
topology: v5e:2x2
jax: 0.10.0
libtpu: 0.0.40
codegen_flags: <defaults>
</compile_context>

<pallas_src>
import math

import jax
import jax.numpy as jnp
from jax.experimental import pallas as pl
from jax.experimental.pallas import tpu as pltpu


def _round_up(x, m):
    return ((x + m - 1) // m) * m


def _proj_softmax_kernel(x_ref, b_ref, w_ref, o_ref, acc_ref):
    k = pl.program_id(1)

    @pl.when(k == 0)
    def _():
        acc_ref[...] = jnp.zeros_like(acc_ref)

    # Partial matmul for this d_model chunk: bf16 operands on the MXU,
    # fp32 accumulation in the VMEM scratch.
    acc_ref[...] += jnp.dot(
        x_ref[...].astype(jnp.bfloat16),
        w_ref[...],
        preferred_element_type=jnp.float32,
    )

    @pl.when(k == pl.num_programs(1) - 1)
    def _():
        logits = acc_ref[...] + b_ref[...].astype(jnp.float32)
        # Numerically stable softmax over the vocab (lane) axis, all fp32.
        m = jnp.max(logits, axis=-1, keepdims=True)
        e = jnp.exp(logits - m)
        denom = jnp.sum(e, axis=-1, keepdims=True)
        # Exact normalization so rows sum to 1 (probabilities may feed a loss).
        # Padded vocab lanes carry a -1e30 bias -> exp(...) == 0 exactly.
        o_ref[...] = (e / denom).astype(o_ref.dtype)


def prepare_projection_params(weight_vd, bias, *, param_dtype=jnp.bfloat16):
    """One-time (init) weight/bias preparation — never runs in the forward.

    weight_vd: PyTorch nn.Linear layout [vocab_size, d_model]
    bias:      [vocab_size]
    Returns (w_dv, bias2, vocab_size): weight transposed to [D, V_pad] in
    `param_dtype`; vocab padded to a multiple of 128 (zero weight columns and
    a -1e30 bias so padded lanes get exactly zero probability); bias fp32
    shaped [1, V_pad].
    """
    V, D = weight_vd.shape
    v_pad = _round_up(V, 128)
    w_dv = jnp.asarray(weight_vd, dtype=param_dtype).T      # transpose ONCE
    b = jnp.asarray(bias, dtype=jnp.float32)
    if v_pad != V:
        w_dv = jnp.pad(w_dv, ((0, 0), (0, v_pad - V)))
        b = jnp.pad(b, (0, v_pad - V), constant_values=-1e30)
    return w_dv, b.reshape(1, v_pad), V


def projection_layer(x, w_dv, bias2, *, vocab_size=None, tm=128, td_max=256,
                     out_dtype=None):
    """Fused linear + softmax.

    x:      [B, S, D]
    w_dv:   [D, V_pad] (bf16, from prepare_projection_params)
    bias2:  [1, V_pad] fp32 (padded lanes = -1e30)
    Returns softmax(x @ W.T + b, axis=-1) with shape [B, S, vocab_size].
    """
    B, S, D = x.shape
    Dw, V_pad = w_dv.shape
    assert Dw == D, "weight must be [d_model, vocab_pad]"
    assert V_pad % 128 == 0, "vocab must be padded to a multiple of 128"
    V = V_pad if vocab_size is None else vocab_size
    out_dtype = x.dtype if out_dtype is None else out_dtype
    M = B * S

    # --- contraction (d_model) tiling: stream the weight in (td, V_pad)
    # chunks so it never has to be fully VMEM-resident (v7x: 64 MiB/TC). ---
    td = D
    if D % 128 == 0:
        for c in range(td_max // 128, 0, -1):
            if D % (128 * c) == 0:
                td = min(D, 128 * c)
                break
    # TODO(synk): for extreme vocab sizes where the (tm, V_pad) fp32 scratch
    # itself no longer fits, switch to a vocab-tiled online-softmax grid.

    # --- row tile: multiple of 8; keep >= 2 M steps so both v7x TCs get work.
    tm = _round_up(max(8, min(tm, _round_up(M, 8))), 8)
    if _round_up(M, tm) // tm < 2 and M > 8:
        tm = _round_up(-(-M // 2), 8)

    # --- generation-aware VMEM budget ---
    try:
        vmem_cap = int(pltpu.get_tpu_info().vmem_capacity_bytes)
    except Exception:
        vmem_cap = 64 * 1024 * 1024          # conservative (v7x per-TC VMEM)
    vmem_budget = (vmem_cap * 9) // 10

    xb = jnp.dtype(x.dtype).itemsize
    wb = jnp.dtype(w_dv.dtype).itemsize
    ob = jnp.dtype(out_dtype).itemsize

    def vmem_need(tm_, td_):
        return (2 * tm_ * td_ * xb            # double-buffered x tile
                + 2 * td_ * V_pad * wb        # double-buffered weight chunk
                + 2 * V_pad * 4               # bias
                + 2 * tm_ * V_pad * ob        # double-buffered out tile
                + 2 * tm_ * V_pad * 4)        # fp32 acc scratch + live exp temp

    while vmem_need(tm, td) > vmem_budget and tm > 8:
        tm = max(8, _round_up(tm // 2, 8))
    while vmem_need(tm, td) > vmem_budget and td % 256 == 0 and D % (td // 2) == 0:
        td //= 2

    M_pad = _round_up(M, tm)
    x2 = x.reshape(M, D)
    if M_pad != M:
        # Pad the row tail; padded rows produce a harmless uniform softmax and
        # are sliced off afterwards.
        x2 = jnp.pad(x2, ((0, M_pad - M), (0, 0)))

    grid = (M_pad // tm, D // td)
    need = vmem_need(tm, td)
    vmem_limit = int(min(max(need * 5 // 4, 32 * 1024 * 1024), vmem_budget))

    cost = pl.CostEstimate(
        flops=2 * M_pad * D * V_pad,
        transcendentals=M_pad * V_pad,
        bytes_accessed=(M_pad * D * xb + grid[0] * D * V_pad * wb
                        + V_pad * 4 + M_pad * V_pad * ob),
    )

    out2 = pl.pallas_call(
        _proj_softmax_kernel,
        out_shape=jax.ShapeDtypeStruct((M_pad, V_pad), out_dtype),
        grid_spec=pltpu.PrefetchScalarGridSpec(
            num_scalar_prefetch=0,
            grid=grid,
            in_specs=[
                pl.BlockSpec((tm, td), lambda i, k: (i, k)),      # x tile
                pl.BlockSpec((1, V_pad), lambda i, k: (0, 0)),    # bias
                # weight last so x / bias DMAs are not queued behind it
                pl.BlockSpec((td, V_pad), lambda i, k: (k, 0)),   # weight chunk
            ],
            out_specs=pl.BlockSpec((tm, V_pad), lambda i, k: (i, 0)),
            scratch_shapes=[pltpu.VMEM((tm, V_pad), jnp.float32)],
        ),
        compiler_params=pltpu.CompilerParams(
            dimension_semantics=("parallel", "arbitrary"),
            vmem_limit_bytes=vmem_limit,
        ),
        cost_estimate=cost,
    )(x2, bias2, w_dv)

    out2 = out2[:M, :V]
    return out2.reshape(B, S, V)


if __name__ == "__main__":
    # Small, lane-friendly shapes consistent with the module's forward.
    batch, seq, d_model, vocab_size = 2, 8, 32, 128

    key = jax.random.PRNGKey(0)
    kx, kw, kb = jax.random.split(key, 3)

    # nn.Linear-style init: uniform(-1/sqrt(D), 1/sqrt(D)), PyTorch layout [V, D].
    bound = 1.0 / math.sqrt(d_model)
    weight = jax.random.uniform(
        kw, (vocab_size, d_model), jnp.float32, minval=-bound, maxval=bound
    )
    bias = jax.random.uniform(
        kb, (vocab_size,), jnp.float32, minval=-bound, maxval=bound
    )
    x = jax.random.normal(kx, (batch, seq, d_model), jnp.float32)

    # One-time init: transpose to [D, V], cast to bf16, pad vocab to 128.
    w_dv, bias2, V = prepare_projection_params(weight, bias)

    out = projection_layer(x, w_dv, bias2, vocab_size=V)
    out = jax.block_until_ready(out)

    # Reference: softmax(x @ W.T + b) in fp32.
    ref = jax.nn.softmax(x @ weight.T + bias, axis=-1)
    assert out.shape == (batch, seq, vocab_size)
    assert jnp.allclose(jnp.sum(out, axis=-1), 1.0, atol=1e-3)
    # bf16 matmul operands -> slightly looser tolerance than a pure fp32 ref.
    assert jnp.allclose(out, ref, atol=3e-3, rtol=3e-2)

    print("KERNEL_OK")
</pallas_src>

<mosaic_0001>
module attributes {stable_mosaic.version = 11 : i64} {
  func.func @_proj_softmax_kernel(%arg0: i32, %arg1: i32, %arg2: memref<8x32xf32, #tpu.memory_space<vmem>>, %arg3: memref<1x128xf32, #tpu.memory_space<vmem>>, %arg4: memref<32x128xbf16, #tpu.memory_space<vmem>>, %arg5: memref<8x128xf32, #tpu.memory_space<vmem>>, %arg6: memref<8x128xf32, #tpu.memory_space<vmem>>) attributes {dimension_semantics = [#tpu.dimension_semantics<parallel>, #tpu.dimension_semantics<arbitrary>], iteration_bounds = array<i64: 2, 1>, scalar_prefetch = 0 : i64, scratch_operands = 1 : i64, tpu.core_type = #tpu.core_type<tc>, window_params = [{transform_indices = @transform_0, window_bounds = array<i64: 8, 32>}, {pipeline_mode = #tpu.pipeline_mode<synchronous>, transform_indices = @transform_1, window_bounds = array<i64: 1, 128>}, {transform_indices = @transform_2, window_bounds = array<i64: 32, 128>}, {transform_indices = @transform_3, window_bounds = array<i64: 8, 128>}]} {
    %c0_i32 = arith.constant 0 : i32
    %0 = arith.cmpi eq, %arg1, %c0_i32 : i32
    %1 = arith.extui %0 : i1 to i32
    %c0_i32_0 = arith.constant 0 : i32
    %2 = arith.cmpi ne, %1, %c0_i32_0 : i32
    scf.if %2 {
      %cst_10 = arith.constant 0.000000e+00 : f32
      %13 = vector.broadcast %cst_10 : f32 to vector<8x128xf32>
      %c0_11 = arith.constant 0 : index
      %c0_12 = arith.constant 0 : index
      %14 = vector.load %arg6[%c0_11, %c0_12] : memref<8x128xf32, #tpu.memory_space<vmem>>, vector<8x128xf32>
      tpu.vector_store %arg6[%c0_11, %c0_12], %13 {strides = array<i32>} : memref<8x128xf32, #tpu.memory_space<vmem>>, vector<8x128xf32>,
    } else {
    }
    %c0 = arith.constant 0 : index
    %c0_1 = arith.constant 0 : index
    %3 = vector.load %arg6[%c0, %c0_1] : memref<8x128xf32, #tpu.memory_space<vmem>>, vector<8x128xf32>
    %c0_2 = arith.constant 0 : index
    %c0_3 = arith.constant 0 : index
    %4 = vector.load %arg2[%c0_2, %c0_3] : memref<8x32xf32, #tpu.memory_space<vmem>>, vector<8x32xf32>
    %5 = arith.truncf %4 : vector<8x32xf32> to vector<8x32xbf16>
    %c0_4 = arith.constant 0 : index
    %c0_5 = arith.constant 0 : index
    %6 = vector.load %arg4[%c0_4, %c0_5] : memref<32x128xbf16, #tpu.memory_space<vmem>>, vector<32x128xbf16>
    %cst = arith.constant dense<0.000000e+00> : vector<8x128xf32>
    %7 = tpu.matmul %5, %6, %cst {dimension_numbers = #tpu.dot_dimension_numbers<[1], [0], [0], [1], [0, 0, 1, 1], [], []>} : vector<8x32xbf16>, vector<32x128xbf16>, vector<8x128xf32> -> vector<8x128xf32>
    %8 = arith.addf %3, %7 : vector<8x128xf32>
    %c0_6 = arith.constant 0 : index
    %c0_7 = arith.constant 0 : index
    %9 = vector.load %arg6[%c0_6, %c0_7] : memref<8x128xf32, #tpu.memory_space<vmem>>, vector<8x128xf32>
    tpu.vector_store %arg6[%c0_6, %c0_7], %8 {strides = array<i32>} : memref<8x128xf32, #tpu.memory_space<vmem>>, vector<8x128xf32>,
    %c0_i32_8 = arith.constant 0 : i32
    %10 = arith.cmpi eq, %arg1, %c0_i32_8 : i32
    %11 = arith.extui %10 : i1 to i32
    %c0_i32_9 = arith.constant 0 : i32
    %12 = arith.cmpi ne, %11, %c0_i32_9 : i32
    scf.if %12 {
      %c0_10 = arith.constant 0 : index
      %c0_11 = arith.constant 0 : index
      %13 = vector.load %arg6[%c0_10, %c0_11] : memref<8x128xf32, #tpu.memory_space<vmem>>, vector<8x128xf32>
      %c0_12 = arith.constant 0 : index
      %c0_13 = arith.constant 0 : index
      %14 = vector.load %arg3[%c0_12, %c0_13] : memref<1x128xf32, #tpu.memory_space<vmem>>, vector<1x128xf32>
      %15 = vector.broadcast %14 : vector<1x128xf32> to vector<8x128xf32>
      %16 = arith.addf %13, %15 : vector<8x128xf32>
      %cst_14 = arith.constant dense<0xFF800000> : vector<8xf32>
      %17 = vector.multi_reduction <maximumf>, %16, %cst_14 [1] : vector<8x128xf32> to vector<8xf32>
      %18 = vector.shape_cast %17 : vector<8xf32> to vector<8x1xf32>
      %19 = vector.broadcast %18 : vector<8x1xf32> to vector<8x128xf32>
      %20 = arith.subf %16, %19 : vector<8x128xf32>
      %21 = math.exp %20 : vector<8x128xf32>
      %cst_15 = arith.constant dense<0.000000e+00> : vector<8xf32>
      %22 = vector.multi_reduction <add>, %21, %cst_15 [1] : vector<8x128xf32> to vector<8xf32>
      %23 = vector.shape_cast %22 : vector<8xf32> to vector<8x1xf32>
      %24 = vector.broadcast %23 : vector<8x1xf32> to vector<8x128xf32>
      %25 = arith.divf %21, %24 : vector<8x128xf32>
      %c0_16 = arith.constant 0 : index
      %c0_17 = arith.constant 0 : index
      %26 = vector.load %arg5[%c0_16, %c0_17] : memref<8x128xf32, #tpu.memory_space<vmem>>, vector<8x128xf32>
      tpu.vector_store %arg5[%c0_16, %c0_17], %25 {strides = array<i32>} : memref<8x128xf32, #tpu.memory_space<vmem>>, vector<8x128xf32>,
    } else {
    }
    return
  }
  func.func @transform_0(%arg0: i32, %arg1: i32) -> (i32, i32) {
    %c0_i32 = arith.constant 0 : i32
    return %arg0, %arg1 : i32, i32
  }
  func.func @transform_1(%arg0: i32, %arg1: i32) -> (i32, i32) {
    %c0_i32 = arith.constant 0 : i32
    %c0_i32_0 = arith.constant 0 : i32
    %c0_i32_1 = arith.constant 0 : i32
    return %c0_i32, %c0_i32_0 : i32, i32
  }
  func.func @transform_2(%arg0: i32, %arg1: i32) -> (i32, i32) {
    %c0_i32 = arith.constant 0 : i32
    %c0_i32_0 = arith.constant 0 : i32
    return %arg1, %c0_i32 : i32, i32
  }
  func.func @transform_3(%arg0: i32, %arg1: i32) -> (i32, i32) {
    %c0_i32 = arith.constant 0 : i32
    %c0_i32_0 = arith.constant 0 : i32
    return %arg0, %c0_i32 : i32, i32
  }
}

</mosaic_0001>

<llo_original>
// kernel: tpu_custom_call.1
$region0: #{tpu_custom_call.1}
  #allocation0 [shape = 'u32[]', space=smem, size = 0x4, offset = 0x4, fixed_abs, tag = 'smem constant byte address 0x4 - core index']
  #allocation1 [shape = 'u32[72,128]{1,0:T(1,128)}', space=vmem, size = 0x9000, scoped, tag = 'internal scratch']
  #allocation2 [shape = 'f32[8,128]{1,0:T(8,128)}', space=vmem, size = 0x1000, scoped, tag = 'scratch operand']
  %s0 = inlined_call_operand.hbm [shape: f32[16,32], index: 0, kind: input, shape index: {}]
  %s1 = inlined_call_operand.hbm [shape: f32[1,128], index: 1, kind: input, shape index: {}]
  %s2 = inlined_call_operand.hbm [shape: bf16[32,128], index: 2, kind: input, shape index: {}]
  %s3 = inlined_call_operand.hbm [shape: f32[16,128], index: 3, kind: output, shape index: {}]
  %s4 = sld [smem:[#allocation0]]
  $region65: #{tpu_custom_call.1} parent=0
    _
  %s6 = ssub.s32 1, %s4
  %s7 = scalar_select 0, %s6, %s4
  $region1: #{tpu_custom_call.1} parent=0
    #allocation3 [shape = 'u8[8192]{0}', space=vmem, size = 0x2000, scoped, tag = 'input window, operand 0']
    #allocation4 [shape = 's32[2]{0}', space=sflag, size = 0x8, scoped, tag = 'scoped memory for tpu_custom_call.1']
    #allocation5 [shape = 's32[2]{0}', space=sflag, size = 0x8, scoped, tag = 'scoped memory for tpu_custom_call.1']
    #allocation6 [shape = 'u8[512]{0}', space=vmem, size = 0x400, scoped, tag = 'input window, operand 1, single buffered']
    #allocation7 [shape = 's32[1]{0}', space=sflag, size = 0x4, scoped, tag = 'scoped memory for tpu_custom_call.1']
    #allocation8 [shape = 'u8[8192]{0}', space=vmem, size = 0x2000, scoped, tag = 'input window, operand 2, single buffered']
    #allocation9 [shape = 'u8[8192]{0}', space=vmem, size = 0x2000, scoped, tag = 'output window, operand 0']
    %8 = vsyncpa [#allocation4], 0
    %s9 = scalar_lea.sflag [#allocation4], 1
    %10 = vsyncpa %s9, 0
    %11 = vsyncpa [#allocation7], 0
    %12 = vsyncpa [#allocation5], 0
    %s13 = scalar_lea.sflag [#allocation5], 1
    %14 = vsyncpa %s13, 0
    loop: start=0, step=1, limit=4
    $region2: #{tpu_custom_call.1} parent=1 // loop_pre_header
      _
    $region3: #{tpu_custom_call.1} parent=1 // loop_header
      %s16 = sphi 0, %s20
      %p17 = scmp.ge.s32.totalorder %s16, 4
      %s23 = sphi 0, %s35
      %s24 = sphi 0, %s31
      %s25 = sphi 0, %s23
      %s26 = sphi 0, %s24
      %s27 = sphi 0, %s25
      %s28 = sphi 0, %s26
      %s40 = sphi 0, %s42
      %s43 = sphi 0, %s40
      %s44 = sphi 0, %s43
      %s60 = sphi 0, %s44
      %s64 = sphi 0, %s64
      %s66 = sphi 0, %s64
      %s67 = sphi 0, %s66
      %s81 = sphi 0, %s67
      %s87 = sphi 0, %s89
      %s90 = sphi 0, %s87
      %s91 = sphi 0, %s90
      %s107 = sphi 0, %s91
      %s113 = sphi 0, %s115
      %s116 = sphi 0, %s113
      %s117 = sphi 0, %s116
      %s133 = sphi 0, %s117
    $region4: #{tpu_custom_call.1} parent=1 // loop_header_branch
      %19 = sbr.rel (%p17) target = $region8
    $region5: #{tpu_custom_call.1} parent=1 // loop_body
      %s21 = ssub.s32 %s16, 1
      %s22 = ssub.s32 %s16, 2
      %s29 = sadd.s32 1, %s24
      %p30 = scmp.ge.s32.totalorder %s29, 1
      %s31 = scalar_select %p30, 0, %s29
      %s32 = sadd.s32 1, %s23
      %s33 = scalar_select %p30, %s32, %s23
      %p34 = scmp.ge.s32.totalorder %s33, 2
      %s35 = scalar_select %p34, 0, %s33
      %s36 = ssub.s32 %s23, %s35
      %s37 = ssub.s32 %s24, %s31
      %s38 = sor.u32 %s36, %s37
      %p39 = scmp.eq.s32.totalorder %s38, 0
      %s41 = sadd.s32 %s40, 1
      %s42 = scalar_select %p39, %s40, %s41
      %p45 = pneg %p39
      %p46 = scmp.eq.s32.totalorder %s16, 1
      %p47 = por %p45, %p46
      %p48 = scmp.ne.s32.totalorder %s40, %s43
      %p49 = scmp.eq.s32.totalorder %s16, 0
      %p50 = por %p48, %p49
      %p51 = scmp.ne.s32.totalorder %s40, %s43
      %p52 = scmp.eq.s32.totalorder %s21, 1
      %p53 = por %p51, %p52
      %p54 = scmp.ne.s32.totalorder %s43, %s44
      %p55 = scmp.eq.s32.totalorder %s21, 0
      %p56 = por %p54, %p55
      %p57 = scmp.ne.s32.totalorder %s43, %s44
      %p58 = scmp.eq.s32.totalorder %s22, 1
      %p59 = por %p57, %p58
      %p61 = scmp.ne.s32.totalorder %s44, %s60
      %p62 = scmp.eq.s32.totalorder %s22, 0
      %p63 = por %p61, %p62
      %s65 = sadd.s32 %s64, 1
      %p68 = scmp.eq.s32.totalorder %s16, 1
      %p69 = scmp.ne.s32.totalorder %s64, %s66
      %p70 = scmp.eq.s32.totalorder %s16, 0
      %p71 = por %p69, %p70
      %p72 = scmp.ne.s32.totalorder %s64, %s66
      %p73 = scmp.eq.s32.totalorder %s21, 1
      %p74 = por %p72, %p73
      %p75 = scmp.ne.s32.totalorder %s66, %s67
      %p76 = scmp.eq.s32.totalorder %s21, 0
      %p77 = por %p75, %p76
      %p78 = scmp.ne.s32.totalorder %s66, %s67
      %p79 = scmp.eq.s32.totalorder %s22, 1
      %p80 = por %p78, %p79
      %p82 = scmp.ne.s32.totalorder %s67, %s81
      %p83 = scmp.eq.s32.totalorder %s22, 0
      %p84 = por %p82, %p83
      %s85 = ssub.s32 %s24, %s31
      %p86 = scmp.eq.s32.totalorder %s85, 0
      %s88 = sadd.s32 %s87, 1
      %s89 = scalar_select %p86, %s87, %s88
      %p92 = pneg %p86
      %p93 = scmp.eq.s32.totalorder %s16, 1
      %p94 = por %p92, %p93
      %p95 = scmp.ne.s32.totalorder %s87, %s90
      %p96 = scmp.eq.s32.totalorder %s16, 0
      %p97 = por %p95, %p96
      %p98 = scmp.ne.s32.totalorder %s87, %s90
      %p99 = scmp.eq.s32.totalorder %s21, 1
      %p100 = por %p98, %p99
      %p101 = scmp.ne.s32.totalorder %s90, %s91
      %p102 = scmp.eq.s32.totalorder %s21, 0
      %p103 = por %p101, %p102
      %p104 = scmp.ne.s32.totalorder %s90, %s91
      %p105 = scmp.eq.s32.totalorder %s22, 1
      %p106 = por %p104, %p105
      %p108 = scmp.ne.s32.totalorder %s91, %s107
      %p109 = scmp.eq.s32.totalorder %s22, 0
      %p110 = por %p108, %p109
      %s111 = ssub.s32 %s23, %s35
      %p112 = scmp.eq.s32.totalorder %s111, 0
      %s114 = sadd.s32 %s113, 1
      %s115 = scalar_select %p112, %s113, %s114
      %p118 = pneg %p112
      %p119 = scmp.eq.s32.totalorder %s16, 1
      %p120 = por %p118, %p119
      %p121 = scmp.ne.s32.totalorder %s113, %s116
      %p122 = scmp.eq.s32.totalorder %s16, 0
      %p123 = por %p121, %p122
      %p124 = scmp.ne.s32.totalorder %s113, %s116
      %p125 = scmp.eq.s32.totalorder %s21, 1
      %p126 = por %p124, %p125
      %p127 = scmp.ne.s32.totalorder %s116, %s117
      %p128 = scmp.eq.s32.totalorder %s21, 0
      %p129 = por %p127, %p128
      %p130 = scmp.ne.s32.totalorder %s116, %s117
      %p131 = scmp.eq.s32.totalorder %s22, 1
      %p132 = por %p130, %p131
      %p134 = scmp.ne.s32.totalorder %s117, %s133
      %p135 = scmp.eq.s32.totalorder %s22, 0
      %p136 = por %p134, %p135
      %p137 = scmp.le.s32.totalorder 1, %s16
      %p138 = scmp.lt.s32.totalorder %s16, 3
      %p139 = pnand %p137, %p138
      %p140 = pneg %p139
      // Predicated region
      $region9: #{tpu_custom_call.1} parent=5 // pred_check
        _
      $region10: #{tpu_custom_call.1} parent=5 // pred_check_branch
        %142 = sbr.rel (%p139) target = $region12
      $region11: #{tpu_custom_call.1} parent=5 // pred_region
        %s143 = ssub.s32 %s16, 1
        // Predicated region
        $region13: #{tpu_custom_call.1} parent=11 // pred_check
          %p144 = pneg %p77
        $region14: #{tpu_custom_call.1} parent=11 // pred_check_branch
          %146 = sbr.rel (%p144) target = $region16
        $region15: #{tpu_custom_call.1} parent=11 // pred_region
          %148 = vsyncadd [#allocation7], 0
          %s150 = sshll.u32 %s1, 4
          %s151 = int_to_ptr.hbm [resolvable:$true] %s150
          %s152 = sshll.u32 [#allocation6], 4
          %s153 = int_to_ptr.vmem [resolvable:$true] %s152
          %155 = dma.hbm_to_vmem [thread:$0]  %s151, 16, %s153, [#allocation7]
        $region16: #{tpu_custom_call.1} parent=11 // pred_fallthru
          _
        // Predicated region
        $region17: #{tpu_custom_call.1} parent=11 // pred_check
          %p156 = pneg %p103
        $region18: #{tpu_custom_call.1} parent=11 // pred_check_branch
          %158 = sbr.rel (%p156) target = $region20
        $region19: #{tpu_custom_call.1} parent=11 // pred_region
          %s159 = smul.u32 4, %s26
          %161 = vsyncadd [#allocation7], 0
          %s162 = smul.addr %s159, 4
          %s163 = scalar_lea.hbm %s2, %s162
          %s164 = sshll.u32 %s163, 4
          %s165 = int_to_ptr.hbm [resolvable:$true] %s164
          %s166 = sshll.u32 [#allocation8], 4
          %s167 = int_to_ptr.vmem [resolvable:$true] %s166
          %172 = dma.hbm_to_vmem [thread:$0]  %s165, 256, %s167, [#allocation7], 64, 64, 4
        $region20: #{tpu_custom_call.1} parent=11 // pred_fallthru
          _
      $region12: #{tpu_custom_call.1} parent=5 // pred_fallthru
        _
      %p173 = scmp.lt.s32.totalorder %s16, 2
      // Predicated region
      $region21: #{tpu_custom_call.1} parent=5 // pred_check
        %p174 = pneg %p173
      $region22: #{tpu_custom_call.1} parent=5 // pred_check_branch
        %176 = sbr.rel (%p174) target = $region24
      $region23: #{tpu_custom_call.1} parent=5 // pred_region
        // Predicated region
        $region25: #{tpu_custom_call.1} parent=23 // pred_check
          %p177 = pneg %p50
        $region26: #{tpu_custom_call.1} parent=23 // pred_check_branch
          %179 = sbr.rel (%p177) target = $region28
        $region27: #{tpu_custom_call.1} parent=23 // pred_region
          %s180 = sand.u32 %s40, 1
          %s181 = scalar_lea.sflag [#allocation4], %s180
          %s182 = sand.u32 %s40, 1
          %s183 = smul.addr %s182, 8
          %s184 = scalar_lea.vmem [#allocation3], %s183
          %186 = vsyncadd %s181, 0
          %s187 = sadd.s32 %s24, %s23
          %s188 = smul.addr %s187, 8
          %s189 = scalar_lea.hbm %s0, %s188
          %s191 = sshll.u32 %s189, 4
          %s192 = int_to_ptr.hbm [resolvable:$true] %s191
          %s193 = sshll.u32 %s184, 4
          %s194 = int_to_ptr.vmem [resolvable:$true] %s193
          %196 = dma.hbm_to_vmem [thread:$0]  %s192, 128, %s194, %s181
        $region28: #{tpu_custom_call.1} parent=23 // pred_fallthru
          _
      $region24: #{tpu_custom_call.1} parent=5 // pred_fallthru
        _
      %p197 = scmp.le.s32.totalorder 1, %s16
      %p198 = scmp.lt.s32.totalorder %s16, 3
      %p199 = pnand %p197, %p198
      %p200 = pneg %p199
      // Predicated region
      $region29: #{tpu_custom_call.1} parent=5 // pred_check
        _
      $region30: #{tpu_custom_call.1} parent=5 // pred_check_branch
        %202 = sbr.rel (%p199) target = $region32
      $region31: #{tpu_custom_call.1} parent=5 // pred_region
        %s203 = ssub.s32 %s16, 1
        %s204 = sand.u32 %s43, 1
        %s205 = scalar_lea.sflag [#allocation4], %s204
        %s206 = sand.u32 %s43, 1
        %s207 = smul.addr %s206, 8
        %s208 = scalar_lea.vmem [#allocation3], %s207
        // Predicated region
        $region33: #{tpu_custom_call.1} parent=31 // pred_check
          %p209 = pneg %p56
        $region34: #{tpu_custom_call.1} parent=31 // pred_check_branch
          %211 = sbr.rel (%p209) target = $region36
        $region35: #{tpu_custom_call.1} parent=31 // pred_region
          %213 = dma.done %s205, 128
        $region36: #{tpu_custom_call.1} parent=31 // pred_fallthru
          _
        // Predicated region
        $region37: #{tpu_custom_call.1} parent=31 // pred_check
          %p214 = pneg %p77
        $region38: #{tpu_custom_call.1} parent=31 // pred_check_branch
          %216 = sbr.rel (%p214) target = $region40
        $region39: #{tpu_custom_call.1} parent=31 // pred_region
          %218 = dma.done [#allocation7], 16
        $region40: #{tpu_custom_call.1} parent=31 // pred_fallthru
          _
        // Predicated region
        $region41: #{tpu_custom_call.1} parent=31 // pred_check
          %p219 = pneg %p103
        $region42: #{tpu_custom_call.1} parent=31 // pred_check_branch
          %221 = sbr.rel (%p219) target = $region44
        $region43: #{tpu_custom_call.1} parent=31 // pred_region
          %223 = dma.done [#allocation7], 256
        $region44: #{tpu_custom_call.1} parent=31 // pred_fallthru
          _
        %s224 = sand.u32 %s43, 1
        %s225 = scalar_lea.sflag [#allocation4], %s224
        %s226 = sand.u32 %s43, 1
        %s227 = smul.addr %s226, 8
        %s228 = scalar_lea.vmem [#allocation3], %s227
        %p229 = pneg %p56
        %p230 = pneg %p53
        %p231 = pneg %p77
        %p232 = pneg %p74
        %p233 = pneg %p103
        %p234 = pneg %p100
        %p235 = pneg %p129
        %p236 = pneg %p126
        %s237 = sand.u32 %s116, 1
        %s238 = scalar_lea.sflag [#allocation5], %s237
        %s239 = sand.u32 %s116, 1
        %s240 = smul.addr %s239, 8
        %s241 = scalar_lea.vmem [#allocation9], %s240
        %s242 = smul.u32 4, %s26
        %p244 = scmp.eq.s32.totalorder %s26, 0
        // Predicated region
        $region45: #{tpu_custom_call.1} parent=31 // pred_check
          %p245 = pneg %p244
        $region46: #{tpu_custom_call.1} parent=31 // pred_check_branch
          %247 = sbr.rel (%p245) target = $region48
        $region47: #{tpu_custom_call.1} parent=31 // pred_region
          %248 = vst [vmem:[#allocation2] sm:$0xff] 0.0
        $region48: #{tpu_custom_call.1} parent=31 // pred_fallthru
          _
        %v249 = vld [vmem:[#allocation2] sm:$0xff]
        %v250 = vld [vmem:[%s208] sm:$0xff]
        %v251 = vpack.c.bf16 %v250, %v250
        %v252 = vld [vmem:[#allocation8] sm:$0xf]
        %v253 = vld [vmem:[#allocation8 + $0x4] sm:$0xf]
        %v254 = vld [vmem:[#allocation8 + $0x8] sm:$0xf]
        %v255 = vld [vmem:[#allocation8 + $0xc] sm:$0xf]
        %v260 = vunpack.c.l.b16 %v252
        %v261 = vunpack.c.l.b16 %v253
        %v262 = vunpack.c.l.b16 %v254
        %v263 = vunpack.c.l.b16 %v255
        %v264 = vpack.c.b16 %v261, %v260
        %v265 = vpack.c.b16 %v263, %v262
        %vm268 = vcmask 261120
        %v270 = vsel %vm268, %v251, 0
        %272 = vmatpush.bf16.msra.mxu0 0
        %273 = vmatpush.bf16.msra.mxu0 0
        %274 = vmatpush.bf16.msra.mxu0 0
        %275 = vmatpush.bf16.msra.mxu0 0
        %276 = vmatpush.bf16.msra.mxu0 0
        %277 = vmatpush.bf16.msra.mxu0 0
        %278 = vmatpush.bf16.msra.mxu0 %v265
        %279 = vmatpush.bf16.msra.mxu0 %v264
        %280 = vmatmul.bf16.gmra.mxu0 %v270
        %v281 = vpop.f32.mrf.mxu0
        %v282 = vadd.f32 0.0, %v281
        %v283 = vpop.f32.mrf.mxu0
        %284 = vdwg.mxu0
        %v285 = vadd.f32 %v249, %v282
        %286 = vst [vmem:[#allocation2] sm:$0xff] %v285
        // Predicated region
        $region49: #{tpu_custom_call.1} parent=31 // pred_check
          %p287 = pneg %p244
        $region50: #{tpu_custom_call.1} parent=31 // pred_check_branch
          %289 = sbr.rel (%p287) target = $region52
        $region51: #{tpu_custom_call.1} parent=31 // pred_region
          %v290 = vld [vmem:[#allocation2] sm:$0xff]
          %v291 = vld [vmem:[#allocation6] sm:$0x1]
          %v293 = vperm.slane %v291, 0
          %v295 = vadd.f32 %v290, %v293
          %296 = vmax.xlane.f32.xlu0 %v295
          %v297 = vpop.xlane.xlu0 %296
          %v298 = vsub.f32 %v295, %v297
          %v299 = vmul.f32 %v298, 1.442695
          %v300 = vpow.pop %v299
          %301 = vadd.xlane.f32.xlu0 %v300
          %v302 = vpop.xlane.xlu0 %301
          %v303 = vrcp.pop %v302
          %v304 = vmul.f32 %v302, %v303
          %v305 = vsub.f32 1.0, %v304
          %v306 = vmul.f32 %v303, %v305
          %v307 = vadd.f32 %v303, %v306
          %vm308 = vweird.f32 %v302
          %vm309 = vweird.f32 %v303
          %vm310 = vmor %vm308, %vm309
          %v311 = vsel %vm310, %v303, %v307
          %v312 = vand.u32 2147483647, %v302
          %vm313 = vcmp.eq.f32.partialorder %v312, 8.507059e+37
          %v314 = vand.u32 %v302, 2147483648
          %v315 = vor.u32 1.1754944e-38, %v314
          %v316 = vsel %vm313, %v315, %v311
          %v317 = vmul.f32 %v300, %v316
          %318 = vst [vmem:[%s241] sm:$0xff] %v317
        $region52: #{tpu_custom_call.1} parent=31 // pred_fallthru
          _
        %s319 = sand.u32 %s116, 1
        %s320 = scalar_lea.sflag [#allocation5], %s319
        %s321 = sand.u32 %s116, 1
        %s322 = smul.addr %s321, 8
        %s323 = scalar_lea.vmem [#allocation9], %s322
        // Predicated region
        $region53: #{tpu_custom_call.1} parent=31 // pred_check
          %p324 = pneg %p126
        $region54: #{tpu_custom_call.1} parent=31 // pred_check_branch
          %326 = sbr.rel (%p324) target = $region56
        $region55: #{tpu_custom_call.1} parent=31 // pred_region
          %328 = vsyncadd %s320, 0
          %s329 = smul.addr %s25, 8
          %s330 = scalar_lea.hbm %s3, %s329
          %s332 = sshll.u32 %s323, 4
          %s333 = int_to_ptr.vmem [resolvable:$true] %s332
          %s334 = sshll.u32 %s330, 4
          %s335 = int_to_ptr.hbm [resolvable:$true] %s334
          %337 = dma.vmem_to_hbm [thread:$0]  %s333, 128, %s335, %s320
        $region56: #{tpu_custom_call.1} parent=31 // pred_fallthru
          _
      $region32: #{tpu_custom_call.1} parent=5 // pred_fallthru
        _
      %p338 = scmp.le.s32.totalorder 2, %s16
      // Predicated region
      $region57: #{tpu_custom_call.1} parent=5 // pred_check
        %p339 = pneg %p338
      $region58: #{tpu_custom_call.1} parent=5 // pred_check_branch
        %341 = sbr.rel (%p339) target = $region60
      $region59: #{tpu_custom_call.1} parent=5 // pred_region
        %s342 = ssub.s32 %s16, 2
        // Predicated region
        $region61: #{tpu_custom_call.1} parent=59 // pred_check
          %p343 = pneg %p132
        $region62: #{tpu_custom_call.1} parent=59 // pred_check_branch
          %345 = sbr.rel (%p343) target = $region64
        $region63: #{tpu_custom_call.1} parent=59 // pred_region
          %s346 = sand.u32 %s117, 1
          %s347 = scalar_lea.sflag [#allocation5], %s346
          %s348 = sand.u32 %s117, 1
          %s349 = smul.addr %s348, 8
          %s350 = scalar_lea.vmem [#allocation9], %s349
          %352 = dma.done %s347, 128
        $region64: #{tpu_custom_call.1} parent=59 // pred_fallthru
          _
      $region60: #{tpu_custom_call.1} parent=5 // pred_fallthru
        _
    $region6: #{tpu_custom_call.1} parent=1 // loop_footer
      %s20 = sadd.s32 1, %s16
    $region7: #{tpu_custom_call.1} parent=1 // loop_footer_branch
      %15 = sbr.rel target = $region3
    $region8: #{tpu_custom_call.1} parent=1 // loop_exit
      _
    %353 = vsyncpa [#allocation4], 1
    %s354 = scalar_lea.sflag [#allocation4], 1
    %355 = vsyncpa %s354, 1
    %356 = vsyncpa [#allocation7], 1
    %357 = vsyncpa [#allocation5], 1
    %s358 = scalar_lea.sflag [#allocation5], 1
    %359 = vsyncpa %s358, 1

</llo_original>
